<compile_context>
chip_gen: v5e
topology: v5e:2x2
jax: 0.10.0
libtpu: 0.0.40
codegen_flags: <defaults>
</compile_context>

<pallas_src>
import functools

import jax
import jax.numpy as jnp
from jax.experimental import pallas as pl
from jax.experimental.pallas import tpu as pltpu

INPUT_SIZE = 3
HIDDEN_SIZE = 8
NUM_CLASSES = 2
BN_EPS = 1e-5

LAYER_DIMS = [(INPUT_SIZE, 7), (7, HIDDEN_SIZE), (HIDDEN_SIZE, 7), (7, 4), (4, NUM_CLASSES)]
NUM_LAYERS = len(LAYER_DIMS)

P = 8          # padded feature width (max of all layer widths)
LANE = 128     # TPU lane count; batch axis is padded to a multiple of this

# offsets into the packed (13, P, 1) vector stack
BIAS_OFF = 0                      # 5 biases
GAMMA_OFF = NUM_LAYERS            # 4 gammas
BETA_OFF = 2 * NUM_LAYERS - 1     # 4 betas


def net_kernel(x_ref, w_ref, vec_ref, o_ref, *, n_valid):
    """x_ref: (INPUT_SIZE, Bp) feature-major input (batch on lanes), zero padded.
    w_ref: (5, P, P) weights stored (out, in).  vec_ref: (13, P, 1) bias/gamma/beta.
    o_ref: (NUM_CLASSES, Bp) output."""
    x = x_ref[...]
    b_pad = x.shape[1]

    # Hoisted, single loads of the packed parameter slabs (static indices).
    ws = [w_ref[i] for i in range(NUM_LAYERS)]                       # (P, P)
    bs = [vec_ref[BIAS_OFF + i] for i in range(NUM_LAYERS)]          # (P, 1)
    gs = [vec_ref[GAMMA_OFF + i] for i in range(NUM_LAYERS - 1)]     # (P, 1)
    betas = [vec_ref[BETA_OFF + i] for i in range(NUM_LAYERS - 1)]   # (P, 1)

    needs_mask = n_valid != b_pad      # trace-time Python bool
    if needs_mask:
        lane = jax.lax.broadcasted_iota(jnp.int32, (P, b_pad), 1)
        valid = lane < n_valid
    inv_n = jnp.float32(1.0 / n_valid)

    h = x
    for i in range(NUM_LAYERS):
        # First layer: static lane-slice of the weight so the input slab stays
        # (3, Bp).  All layers: (P,P)@(P,Bp) tiny contraction on the MXU
        # (vector-extended slot has slack); batch stays lane-dense.
        w = ws[i][:, :INPUT_SIZE] if i == 0 else ws[i]
        h = jnp.dot(w, h, preferred_element_type=jnp.float32) + bs[i]
        if i < NUM_LAYERS - 1:
            h = jnp.tanh(h)                                   # EUP
            hm = jnp.where(valid, h, 0.0) if needs_mask else h
            # Single full-width stats pass: sum + sum-of-squares.
            mu = jnp.sum(hm, axis=1, keepdims=True) * inv_n   # per-feature mean
            sumsq = jnp.sum(hm * hm, axis=1, keepdims=True)
            var = sumsq * inv_n - mu * mu                     # biased variance
            scale = gs[i] * jax.lax.rsqrt(var + BN_EPS)       # fold on (P,1) side
            h = (h - mu) * scale + betas[i]
    # Store only the NUM_CLASSES valid feature rows (lane-dense (2, Bp) store).
    o_ref[...] = h[:NUM_CLASSES]


def net_forward(x, w_stack, vec_stack):
    """x: (B, INPUT_SIZE) float32 -> (B, NUM_CLASSES) float32."""
    B = x.shape[0]
    b_pad = pl.cdiv(B, LANE) * LANE

    # Layout plumbing: single fused transpose+pad to a (3, Bp) lane-dense slab.
    xt = jnp.pad(x.T.astype(jnp.float32), ((0, 0), (0, b_pad - B)))

    vmem = pl.BlockSpec(memory_space=pltpu.MemorySpace.VMEM)
    out = pl.pallas_call(
        functools.partial(net_kernel, n_valid=B),
        out_shape=jax.ShapeDtypeStruct((NUM_CLASSES, b_pad), jnp.float32),
        in_specs=[vmem, vmem, vmem],
        out_specs=vmem,
        compiler_params=pltpu.CompilerParams(
            # Tiny usage at these batch sizes; raise toward ~64-100 MiB on
            # v5e/v6e (128 MiB physical) for very large resident batches.
            # v7x (64 MiB physical) needs the chunked fallback instead.
            vmem_limit_bytes=32 * 1024 * 1024,
        ),
    )(xt, w_stack, vec_stack)
    # Back to the PyTorch (B, num_classes) convention.
    return out[:, :B].T


def init_params(key):
    """PyTorch-Linear-like init (uniform +/- 1/sqrt(fan_in)); BN gamma=1, beta=0."""
    params = []
    keys = jax.random.split(key, 2 * NUM_LAYERS)
    for i, (din, dout) in enumerate(LAYER_DIMS):
        bound = 1.0 / (din ** 0.5)
        w = jax.random.uniform(keys[2 * i], (din, dout), jnp.float32, -bound, bound)
        b = jax.random.uniform(keys[2 * i + 1], (dout,), jnp.float32, -bound, bound)
        layer = {"w": w, "b": b}
        if i < NUM_LAYERS - 1:
            layer["gamma"] = jnp.ones((dout,), jnp.float32)
            layer["beta"] = jnp.zeros((dout,), jnp.float32)
        params.append(layer)
    return params


def pack_params(params):
    """Pack per-layer params into two zero-padded arrays for 2 DMAs."""
    w_stack = jnp.zeros((NUM_LAYERS, P, P), jnp.float32)
    for i, layer in enumerate(params):
        din, dout = layer["w"].shape
        w_stack = w_stack.at[i, :dout, :din].set(layer["w"].T)   # stored (out, in)

    def pad_vec(v):
        return jnp.zeros((P,), jnp.float32).at[: v.shape[0]].set(v)

    vecs = [pad_vec(layer["b"]) for layer in params]                     # 0..4
    vecs += [pad_vec(layer["gamma"]) for layer in params[:-1]]           # 5..8
    vecs += [pad_vec(layer["beta"]) for layer in params[:-1]]            # 9..12
    vec_stack = jnp.stack(vecs).reshape(len(vecs), P, 1)
    return w_stack, vec_stack


def net_reference(x, params):
    """Pure-JAX reference in the natural (B, F) layout."""
    h = x.astype(jnp.float32)
    for layer in params:
        h = h @ layer["w"] + layer["b"]
        if "gamma" in layer:
            h = jnp.tanh(h)
            mu = jnp.mean(h, axis=0, keepdims=True)
            var = jnp.mean((h - mu) ** 2, axis=0, keepdims=True)  # biased (BN training)
            h = layer["gamma"] * (h - mu) * jax.lax.rsqrt(var + BN_EPS) + layer["beta"]
    return h


if __name__ == "__main__":
    key = jax.random.PRNGKey(0)
    pkey, xkey1, xkey2 = jax.random.split(key, 3)
    params = init_params(pkey)
    w_stack, vec_stack = pack_params(params)

    fwd = jax.jit(net_forward)

    # Case 1: lane-dense batch (multiple of 128) — no masking path.
    B1 = 1024
    x1 = jax.random.normal(xkey1, (B1, INPUT_SIZE), jnp.float32)
    out1 = jax.block_until_ready(fwd(x1, w_stack, vec_stack))
    ref1 = net_reference(x1, params)
    assert out1.shape == (B1, NUM_CLASSES)
    assert jnp.allclose(out1, ref1, atol=1e-4, rtol=1e-4), float(jnp.max(jnp.abs(out1 - ref1)))

    # Case 2: ragged batch — exercises the in-kernel lane mask for BN stats.
    B2 = 200
    x2 = jax.random.normal(xkey2, (B2, INPUT_SIZE), jnp.float32)
    out2 = jax.block_until_ready(fwd(x2, w_stack, vec_stack))
    ref2 = net_reference(x2, params)
    assert out2.shape == (B2, NUM_CLASSES)
    assert jnp.allclose(out2, ref2, atol=1e-4, rtol=1e-4), float(jnp.max(jnp.abs(out2 - ref2)))

    print("KERNEL_OK")
</pallas_src>

<mosaic_0001>
module attributes {stable_mosaic.version = 11 : i64} {
  func.func @net_kernel(%arg0: memref<3x1024xf32, #tpu.memory_space<vmem>>, %arg1: memref<5x8x8xf32, #tpu.memory_space<vmem>>, %arg2: memref<13x8x1xf32, #tpu.memory_space<vmem>>, %arg3: memref<2x1024xf32, #tpu.memory_space<vmem>>) attributes {dimension_semantics = [], scalar_prefetch = 0 : i64, scratch_operands = 0 : i64, tpu.core_type = #tpu.core_type<tc>} {
    %c0 = arith.constant 0 : index
    %c0_0 = arith.constant 0 : index
    %0 = vector.load %arg0[%c0, %c0_0] : memref<3x1024xf32, #tpu.memory_space<vmem>>, vector<3x1024xf32>
    %c0_1 = arith.constant 0 : index
    %c0_2 = arith.constant 0 : index
    %c0_3 = arith.constant 0 : index
    %1 = vector.load %arg1[%c0_1, %c0_2, %c0_3] : memref<5x8x8xf32, #tpu.memory_space<vmem>>, vector<1x8x8xf32>
    %2 = vector.shape_cast %1 : vector<1x8x8xf32> to vector<8x8xf32>
    %c1 = arith.constant 1 : index
    %c0_4 = arith.constant 0 : index
    %c0_5 = arith.constant 0 : index
    %3 = vector.load %arg1[%c1, %c0_4, %c0_5] : memref<5x8x8xf32, #tpu.memory_space<vmem>>, vector<1x8x8xf32>
    %4 = vector.shape_cast %3 : vector<1x8x8xf32> to vector<8x8xf32>
    %c2 = arith.constant 2 : index
    %c0_6 = arith.constant 0 : index
    %c0_7 = arith.constant 0 : index
    %5 = vector.load %arg1[%c2, %c0_6, %c0_7] : memref<5x8x8xf32, #tpu.memory_space<vmem>>, vector<1x8x8xf32>
    %6 = vector.shape_cast %5 : vector<1x8x8xf32> to vector<8x8xf32>
    %c3 = arith.constant 3 : index
    %c0_8 = arith.constant 0 : index
    %c0_9 = arith.constant 0 : index
    %7 = vector.load %arg1[%c3, %c0_8, %c0_9] : memref<5x8x8xf32, #tpu.memory_space<vmem>>, vector<1x8x8xf32>
    %8 = vector.shape_cast %7 : vector<1x8x8xf32> to vector<8x8xf32>
    %c4 = arith.constant 4 : index
    %c0_10 = arith.constant 0 : index
    %c0_11 = arith.constant 0 : index
    %9 = vector.load %arg1[%c4, %c0_10, %c0_11] : memref<5x8x8xf32, #tpu.memory_space<vmem>>, vector<1x8x8xf32>
    %10 = vector.shape_cast %9 : vector<1x8x8xf32> to vector<8x8xf32>
    %c0_12 = arith.constant 0 : index
    %c0_13 = arith.constant 0 : index
    %c0_14 = arith.constant 0 : index
    %11 = vector.load %arg2[%c0_12, %c0_13, %c0_14] : memref<13x8x1xf32, #tpu.memory_space<vmem>>, vector<1x8x1xf32>
    %12 = vector.shape_cast %11 : vector<1x8x1xf32> to vector<8x1xf32>
    %c1_15 = arith.constant 1 : index
    %c0_16 = arith.constant 0 : index
    %c0_17 = arith.constant 0 : index
    %13 = vector.load %arg2[%c1_15, %c0_16, %c0_17] : memref<13x8x1xf32, #tpu.memory_space<vmem>>, vector<1x8x1xf32>
    %14 = vector.shape_cast %13 : vector<1x8x1xf32> to vector<8x1xf32>
    %c2_18 = arith.constant 2 : index
    %c0_19 = arith.constant 0 : index
    %c0_20 = arith.constant 0 : index
    %15 = vector.load %arg2[%c2_18, %c0_19, %c0_20] : memref<13x8x1xf32, #tpu.memory_space<vmem>>, vector<1x8x1xf32>
    %16 = vector.shape_cast %15 : vector<1x8x1xf32> to vector<8x1xf32>
    %c3_21 = arith.constant 3 : index
    %c0_22 = arith.constant 0 : index
    %c0_23 = arith.constant 0 : index
    %17 = vector.load %arg2[%c3_21, %c0_22, %c0_23] : memref<13x8x1xf32, #tpu.memory_space<vmem>>, vector<1x8x1xf32>
    %18 = vector.shape_cast %17 : vector<1x8x1xf32> to vector<8x1xf32>
    %c4_24 = arith.constant 4 : index
    %c0_25 = arith.constant 0 : index
    %c0_26 = arith.constant 0 : index
    %19 = vector.load %arg2[%c4_24, %c0_25, %c0_26] : memref<13x8x1xf32, #tpu.memory_space<vmem>>, vector<1x8x1xf32>
    %20 = vector.shape_cast %19 : vector<1x8x1xf32> to vector<8x1xf32>
    %c5 = arith.constant 5 : index
    %c0_27 = arith.constant 0 : index
    %c0_28 = arith.constant 0 : index
    %21 = vector.load %arg2[%c5, %c0_27, %c0_28] : memref<13x8x1xf32, #tpu.memory_space<vmem>>, vector<1x8x1xf32>
    %22 = vector.shape_cast %21 : vector<1x8x1xf32> to vector<8x1xf32>
    %c6 = arith.constant 6 : index
    %c0_29 = arith.constant 0 : index
    %c0_30 = arith.constant 0 : index
    %23 = vector.load %arg2[%c6, %c0_29, %c0_30] : memref<13x8x1xf32, #tpu.memory_space<vmem>>, vector<1x8x1xf32>
    %24 = vector.shape_cast %23 : vector<1x8x1xf32> to vector<8x1xf32>
    %c7 = arith.constant 7 : index
    %c0_31 = arith.constant 0 : index
    %c0_32 = arith.constant 0 : index
    %25 = vector.load %arg2[%c7, %c0_31, %c0_32] : memref<13x8x1xf32, #tpu.memory_space<vmem>>, vector<1x8x1xf32>
    %26 = vector.shape_cast %25 : vector<1x8x1xf32> to vector<8x1xf32>
    %c8 = arith.constant 8 : index
    %c0_33 = arith.constant 0 : index
    %c0_34 = arith.constant 0 : index
    %27 = vector.load %arg2[%c8, %c0_33, %c0_34] : memref<13x8x1xf32, #tpu.memory_space<vmem>>, vector<1x8x1xf32>
    %28 = vector.shape_cast %27 : vector<1x8x1xf32> to vector<8x1xf32>
    %c9 = arith.constant 9 : index
    %c0_35 = arith.constant 0 : index
    %c0_36 = arith.constant 0 : index
    %29 = vector.load %arg2[%c9, %c0_35, %c0_36] : memref<13x8x1xf32, #tpu.memory_space<vmem>>, vector<1x8x1xf32>
    %30 = vector.shape_cast %29 : vector<1x8x1xf32> to vector<8x1xf32>
    %c10 = arith.constant 10 : index
    %c0_37 = arith.constant 0 : index
    %c0_38 = arith.constant 0 : index
    %31 = vector.load %arg2[%c10, %c0_37, %c0_38] : memref<13x8x1xf32, #tpu.memory_space<vmem>>, vector<1x8x1xf32>
    %32 = vector.shape_cast %31 : vector<1x8x1xf32> to vector<8x1xf32>
    %c11 = arith.constant 11 : index
    %c0_39 = arith.constant 0 : index
    %c0_40 = arith.constant 0 : index
    %33 = vector.load %arg2[%c11, %c0_39, %c0_40] : memref<13x8x1xf32, #tpu.memory_space<vmem>>, vector<1x8x1xf32>
    %34 = vector.shape_cast %33 : vector<1x8x1xf32> to vector<8x1xf32>
    %c12 = arith.constant 12 : index
    %c0_41 = arith.constant 0 : index
    %c0_42 = arith.constant 0 : index
    %35 = vector.load %arg2[%c12, %c0_41, %c0_42] : memref<13x8x1xf32, #tpu.memory_space<vmem>>, vector<1x8x1xf32>
    %36 = vector.shape_cast %35 : vector<1x8x1xf32> to vector<8x1xf32>
    %37 = vector.extract_strided_slice %2 {offsets = [0, 0], sizes = [8, 3], strides = [1, 1]} : vector<8x8xf32> to vector<8x3xf32>
    %cst = arith.constant dense<0.000000e+00> : vector<8x1024xf32>
    %38 = tpu.matmul %37, %0, %cst {dimension_numbers = #tpu.dot_dimension_numbers<[1], [0], [0], [1], [0, 0, 1, 1], [], []>} : vector<8x3xf32>, vector<3x1024xf32>, vector<8x1024xf32> -> vector<8x1024xf32>
    %39 = vector.broadcast %12 : vector<8x1xf32> to vector<8x1024xf32>
    %40 = arith.addf %38, %39 : vector<8x1024xf32>
    %41 = math.tanh %40 : vector<8x1024xf32>
    %cst_43 = arith.constant dense<0.000000e+00> : vector<8xf32>
    %42 = vector.multi_reduction <add>, %41, %cst_43 [1] : vector<8x1024xf32> to vector<8xf32>
    %43 = vector.shape_cast %42 : vector<8xf32> to vector<8x1xf32>
    %cst_44 = arith.constant 9.765625E-4 : f32
    %44 = vector.broadcast %cst_44 : f32 to vector<8x1xf32>
    %45 = arith.mulf %43, %44 : vector<8x1xf32>
    %46 = arith.mulf %41, %41 : vector<8x1024xf32>
    %cst_45 = arith.constant dense<0.000000e+00> : vector<8xf32>
    %47 = vector.multi_reduction <add>, %46, %cst_45 [1] : vector<8x1024xf32> to vector<8xf32>
    %48 = vector.shape_cast %47 : vector<8xf32> to vector<8x1xf32>
    %cst_46 = arith.constant 9.765625E-4 : f32
    %49 = vector.broadcast %cst_46 : f32 to vector<8x1xf32>
    %50 = arith.mulf %48, %49 : vector<8x1xf32>
    %51 = arith.mulf %45, %45 : vector<8x1xf32>
    %52 = arith.subf %50, %51 : vector<8x1xf32>
    %cst_47 = arith.constant 9.99999974E-6 : f32
    %53 = vector.broadcast %cst_47 : f32 to vector<8x1xf32>
    %54 = arith.addf %52, %53 : vector<8x1xf32>
    %55 = math.rsqrt %54 : vector<8x1xf32>
    %56 = arith.mulf %22, %55 : vector<8x1xf32>
    %57 = vector.broadcast %45 : vector<8x1xf32> to vector<8x1024xf32>
    %58 = arith.subf %41, %57 : vector<8x1024xf32>
    %59 = vector.broadcast %56 : vector<8x1xf32> to vector<8x1024xf32>
    %60 = arith.mulf %58, %59 : vector<8x1024xf32>
    %61 = vector.broadcast %30 : vector<8x1xf32> to vector<8x1024xf32>
    %62 = arith.addf %60, %61 : vector<8x1024xf32>
    %cst_48 = arith.constant dense<0.000000e+00> : vector<8x1024xf32>
    %63 = tpu.matmul %4, %62, %cst_48 {dimension_numbers = #tpu.dot_dimension_numbers<[1], [0], [0], [1], [0, 0, 1, 1], [], []>} : vector<8x8xf32>, vector<8x1024xf32>, vector<8x1024xf32> -> vector<8x1024xf32>
    %64 = vector.broadcast %14 : vector<8x1xf32> to vector<8x1024xf32>
    %65 = arith.addf %63, %64 : vector<8x1024xf32>
    %66 = math.tanh %65 : vector<8x1024xf32>
    %cst_49 = arith.constant dense<0.000000e+00> : vector<8xf32>
    %67 = vector.multi_reduction <add>, %66, %cst_49 [1] : vector<8x1024xf32> to vector<8xf32>
    %68 = vector.shape_cast %67 : vector<8xf32> to vector<8x1xf32>
    %cst_50 = arith.constant 9.765625E-4 : f32
    %69 = vector.broadcast %cst_50 : f32 to vector<8x1xf32>
    %70 = arith.mulf %68, %69 : vector<8x1xf32>
    %71 = arith.mulf %66, %66 : vector<8x1024xf32>
    %cst_51 = arith.constant dense<0.000000e+00> : vector<8xf32>
    %72 = vector.multi_reduction <add>, %71, %cst_51 [1] : vector<8x1024xf32> to vector<8xf32>
    %73 = vector.shape_cast %72 : vector<8xf32> to vector<8x1xf32>
    %cst_52 = arith.constant 9.765625E-4 : f32
    %74 = vector.broadcast %cst_52 : f32 to vector<8x1xf32>
    %75 = arith.mulf %73, %74 : vector<8x1xf32>
    %76 = arith.mulf %70, %70 : vector<8x1xf32>
    %77 = arith.subf %75, %76 : vector<8x1xf32>
    %cst_53 = arith.constant 9.99999974E-6 : f32
    %78 = vector.broadcast %cst_53 : f32 to vector<8x1xf32>
    %79 = arith.addf %77, %78 : vector<8x1xf32>
    %80 = math.rsqrt %79 : vector<8x1xf32>
    %81 = arith.mulf %24, %80 : vector<8x1xf32>
    %82 = vector.broadcast %70 : vector<8x1xf32> to vector<8x1024xf32>
    %83 = arith.subf %66, %82 : vector<8x1024xf32>
    %84 = vector.broadcast %81 : vector<8x1xf32> to vector<8x1024xf32>
    %85 = arith.mulf %83, %84 : vector<8x1024xf32>
    %86 = vector.broadcast %32 : vector<8x1xf32> to vector<8x1024xf32>
    %87 = arith.addf %85, %86 : vector<8x1024xf32>
    %cst_54 = arith.constant dense<0.000000e+00> : vector<8x1024xf32>
    %88 = tpu.matmul %6, %87, %cst_54 {dimension_numbers = #tpu.dot_dimension_numbers<[1], [0], [0], [1], [0, 0, 1, 1], [], []>} : vector<8x8xf32>, vector<8x1024xf32>, vector<8x1024xf32> -> vector<8x1024xf32>
    %89 = vector.broadcast %16 : vector<8x1xf32> to vector<8x1024xf32>
    %90 = arith.addf %88, %89 : vector<8x1024xf32>
    %91 = math.tanh %90 : vector<8x1024xf32>
    %cst_55 = arith.constant dense<0.000000e+00> : vector<8xf32>
    %92 = vector.multi_reduction <add>, %91, %cst_55 [1] : vector<8x1024xf32> to vector<8xf32>
    %93 = vector.shape_cast %92 : vector<8xf32> to vector<8x1xf32>
    %cst_56 = arith.constant 9.765625E-4 : f32
    %94 = vector.broadcast %cst_56 : f32 to vector<8x1xf32>
    %95 = arith.mulf %93, %94 : vector<8x1xf32>
    %96 = arith.mulf %91, %91 : vector<8x1024xf32>
    %cst_57 = arith.constant dense<0.000000e+00> : vector<8xf32>
    %97 = vector.multi_reduction <add>, %96, %cst_57 [1] : vector<8x1024xf32> to vector<8xf32>
    %98 = vector.shape_cast %97 : vector<8xf32> to vector<8x1xf32>
    %cst_58 = arith.constant 9.765625E-4 : f32
    %99 = vector.broadcast %cst_58 : f32 to vector<8x1xf32>
    %100 = arith.mulf %98, %99 : vector<8x1xf32>
    %101 = arith.mulf %95, %95 : vector<8x1xf32>
    %102 = arith.subf %100, %101 : vector<8x1xf32>
    %cst_59 = arith.constant 9.99999974E-6 : f32
    %103 = vector.broadcast %cst_59 : f32 to vector<8x1xf32>
    %104 = arith.addf %102, %103 : vector<8x1xf32>
    %105 = math.rsqrt %104 : vector<8x1xf32>
    %106 = arith.mulf %26, %105 : vector<8x1xf32>
    %107 = vector.broadcast %95 : vector<8x1xf32> to vector<8x1024xf32>
    %108 = arith.subf %91, %107 : vector<8x1024xf32>
    %109 = vector.broadcast %106 : vector<8x1xf32> to vector<8x1024xf32>
    %110 = arith.mulf %108, %109 : vector<8x1024xf32>
    %111 = vector.broadcast %34 : vector<8x1xf32> to vector<8x1024xf32>
    %112 = arith.addf %110, %111 : vector<8x1024xf32>
    %cst_60 = arith.constant dense<0.000000e+00> : vector<8x1024xf32>
    %113 = tpu.matmul %8, %112, %cst_60 {dimension_numbers = #tpu.dot_dimension_numbers<[1], [0], [0], [1], [0, 0, 1, 1], [], []>} : vector<8x8xf32>, vector<8x1024xf32>, vector<8x1024xf32> -> vector<8x1024xf32>
    %114 = vector.broadcast %18 : vector<8x1xf32> to vector<8x1024xf32>
    %115 = arith.addf %113, %114 : vector<8x1024xf32>
    %116 = math.tanh %115 : vector<8x1024xf32>
    %cst_61 = arith.constant dense<0.000000e+00> : vector<8xf32>
    %117 = vector.multi_reduction <add>, %116, %cst_61 [1] : vector<8x1024xf32> to vector<8xf32>
    %118 = vector.shape_cast %117 : vector<8xf32> to vector<8x1xf32>
    %cst_62 = arith.constant 9.765625E-4 : f32
    %119 = vector.broadcast %cst_62 : f32 to vector<8x1xf32>
    %120 = arith.mulf %118, %119 : vector<8x1xf32>
    %121 = arith.mulf %116, %116 : vector<8x1024xf32>
    %cst_63 = arith.constant dense<0.000000e+00> : vector<8xf32>
    %122 = vector.multi_reduction <add>, %121, %cst_63 [1] : vector<8x1024xf32> to vector<8xf32>
    %123 = vector.shape_cast %122 : vector<8xf32> to vector<8x1xf32>
    %cst_64 = arith.constant 9.765625E-4 : f32
    %124 = vector.broadcast %cst_64 : f32 to vector<8x1xf32>
    %125 = arith.mulf %123, %124 : vector<8x1xf32>
    %126 = arith.mulf %120, %120 : vector<8x1xf32>
    %127 = arith.subf %125, %126 : vector<8x1xf32>
    %cst_65 = arith.constant 9.99999974E-6 : f32
    %128 = vector.broadcast %cst_65 : f32 to vector<8x1xf32>
    %129 = arith.addf %127, %128 : vector<8x1xf32>
    %130 = math.rsqrt %129 : vector<8x1xf32>
    %131 = arith.mulf %28, %130 : vector<8x1xf32>
    %132 = vector.broadcast %120 : vector<8x1xf32> to vector<8x1024xf32>
    %133 = arith.subf %116, %132 : vector<8x1024xf32>
    %134 = vector.broadcast %131 : vector<8x1xf32> to vector<8x1024xf32>
    %135 = arith.mulf %133, %134 : vector<8x1024xf32>
    %136 = vector.broadcast %36 : vector<8x1xf32> to vector<8x1024xf32>
    %137 = arith.addf %135, %136 : vector<8x1024xf32>
    %cst_66 = arith.constant dense<0.000000e+00> : vector<8x1024xf32>
    %138 = tpu.matmul %10, %137, %cst_66 {dimension_numbers = #tpu.dot_dimension_numbers<[1], [0], [0], [1], [0, 0, 1, 1], [], []>} : vector<8x8xf32>, vector<8x1024xf32>, vector<8x1024xf32> -> vector<8x1024xf32>
    %139 = vector.broadcast %20 : vector<8x1xf32> to vector<8x1024xf32>
    %140 = arith.addf %138, %139 : vector<8x1024xf32>
    %141 = vector.extract_strided_slice %140 {offsets = [0, 0], sizes = [2, 1024], strides = [1, 1]} : vector<8x1024xf32> to vector<2x1024xf32>
    %c0_67 = arith.constant 0 : index
    %c0_68 = arith.constant 0 : index
    %142 = vector.load %arg3[%c0_67, %c0_68] : memref<2x1024xf32, #tpu.memory_space<vmem>>, vector<2x1024xf32>
    tpu.vector_store %arg3[%c0_67, %c0_68], %141 {strides = array<i32>} : memref<2x1024xf32, #tpu.memory_space<vmem>>, vector<2x1024xf32>,
    return
  }
}

</mosaic_0001>

<llo_original>
// kernel: net_forward.1
$region0: #{net_forward.1}
  #allocation0 [shape = 'u32[]', space=smem, size = 0x4, offset = 0x4, fixed_abs, tag = 'smem constant byte address 0x4 - core index']
  #allocation1 [shape = 'u32[72,128]{1,0:T(1,128)}', space=vmem, size = 0x9000, scoped, tag = 'internal scratch']
  %s0 = inlined_call_operand.vmem [shape: f32[3,1024], index: 0, kind: input, shape index: {}]
  %s1 = inlined_call_operand.vmem [shape: f32[5,8,8], index: 1, kind: input, shape index: {}]
  %s2 = inlined_call_operand.vmem [shape: f32[13,8,1], index: 2, kind: input, shape index: {}]
  %s3 = inlined_call_operand.hbm [shape: f32[2,1024], index: 3, kind: output, shape index: {}]
  %s4 = sld [smem:[#allocation0]]
  $region22: #{net_forward.1} parent=0
    _
  %s6 = ssub.s32 1, %s4
  %s7 = scalar_select 0, %s6, %s4
  $region1: #{net_forward.1} parent=0
    #allocation2 [shape = 'u8[8192]{0}', space=vmem, size = 0x2000, scoped, tag = 'output window, operand 0, single buffered']
    #allocation3 [shape = 's32[1]{0}', space=sflag, size = 0x4, scoped, tag = 'scoped memory for net_forward.1']
    %8 = vsyncpa [#allocation3], 0
    // Predicated region
    $region2: #{net_forward.1} parent=1 // pred_check
      _
    $region3: #{net_forward.1} parent=1 // pred_check_branch
      %10 = sbr.rel (0) target = $region5
    $region4: #{net_forward.1} parent=1 // pred_region
      _
    $region5: #{net_forward.1} parent=1 // pred_fallthru
      _
    // Predicated region
    $region6: #{net_forward.1} parent=1 // pred_check
      _
    $region7: #{net_forward.1} parent=1 // pred_check_branch
      %12 = sbr.rel (0) target = $region9
    $region8: #{net_forward.1} parent=1 // pred_region
      _
    $region9: #{net_forward.1} parent=1 // pred_fallthru
      _
    // Predicated region
    $region10: #{net_forward.1} parent=1 // pred_check
      _
    $region11: #{net_forward.1} parent=1 // pred_check_branch
      %14 = sbr.rel (0) target = $region13
    $region12: #{net_forward.1} parent=1 // pred_region
      _
    $region13: #{net_forward.1} parent=1 // pred_fallthru
      _
    %v15 = vld [vmem:[%s0] sm:$0x77]
    %v16 = vld [vmem:[%s0 + $0x8] sm:$0x77]
    %v17 = vld [vmem:[%s0 + $0x10] sm:$0x77]
    %v18 = vld [vmem:[%s0 + $0x18] sm:$0x77]
    %v19 = vld [vmem:[%s1] sm:$0xff]
    %s20 = scalar_lea.vmem %s1, 8
    %v21 = vld [vmem:[%s20] sm:$0xff]
    %s22 = scalar_lea.vmem %s1, 16
    %v23 = vld [vmem:[%s22] sm:$0xff]
    %s24 = scalar_lea.vmem %s1, 24
    %v25 = vld [vmem:[%s24] sm:$0xff]
    %s26 = scalar_lea.vmem %s1, 32
    %v27 = vld [vmem:[%s26] sm:$0xff]
    %v28 = vld [vmem:[%s2] sm:$0xff]
    %s29 = scalar_lea.vmem %s2, 8
    %v30 = vld [vmem:[%s29] sm:$0xff]
    %s31 = scalar_lea.vmem %s2, 16
    %v32 = vld [vmem:[%s31] sm:$0xff]
    %s33 = scalar_lea.vmem %s2, 24
    %v34 = vld [vmem:[%s33] sm:$0xff]
    %s35 = scalar_lea.vmem %s2, 32
    %v36 = vld [vmem:[%s35] sm:$0xff]
    %s37 = scalar_lea.vmem %s2, 40
    %v38 = vld [vmem:[%s37] sm:$0xff]
    %s39 = scalar_lea.vmem %s2, 48
    %v40 = vld [vmem:[%s39] sm:$0xff]
    %s41 = scalar_lea.vmem %s2, 56
    %v42 = vld [vmem:[%s41] sm:$0xff]
    %s43 = scalar_lea.vmem %s2, 64
    %v44 = vld [vmem:[%s43] sm:$0xff]
    %s45 = scalar_lea.vmem %s2, 72
    %v46 = vld [vmem:[%s45] sm:$0xff]
    %s47 = scalar_lea.vmem %s2, 80
    %v48 = vld [vmem:[%s47] sm:$0xff]
    %s49 = scalar_lea.vmem %s2, 88
    %v50 = vld [vmem:[%s49] sm:$0xff]
    %s51 = scalar_lea.vmem %s2, 96
    %v52 = vld [vmem:[%s51] sm:$0xff]
    %54 = vset.pattern.permute.xlu0 0
    %55 = vperm.xlu0 %54, %v28
    %v56 = vpop.permute.xlu0 %55
    %62 = vst [vmem:[#allocation1] ss:$2 sm:$0xff] %v15
    %s63 = scalar_lea.vmem [#allocation1], 16
    %64 = vst [vmem:[%s63] ss:$2 sm:$0xff] %v16
    %s65 = scalar_lea.vmem [#allocation1], 32
    %66 = vst [vmem:[%s65] ss:$2 sm:$0xff] %v17
    %s67 = scalar_lea.vmem [#allocation1], 48
    %68 = vst [vmem:[%s67] ss:$2 sm:$0xff] %v18
    %v69 = vld.sshfl [vmem:[#allocation1] sm:$0xff pattern:$0x75316420]
    %v70 = vld.sshfl [vmem:[#allocation1 + $0x8] sm:$0xff pattern:$0x75316420]
    %v71 = vld.sshfl [vmem:[#allocation1 + $0x10] sm:$0xff pattern:$0x75316420]
    %v72 = vld.sshfl [vmem:[#allocation1 + $0x18] sm:$0xff pattern:$0x75316420]
    %v73 = vld.sshfl [vmem:[#allocation1 + $0x20] sm:$0xff pattern:$0x75316420]
    %v74 = vld.sshfl [vmem:[#allocation1 + $0x28] sm:$0xff pattern:$0x75316420]
    %v75 = vld.sshfl [vmem:[#allocation1 + $0x30] sm:$0xff pattern:$0x75316420]
    %v76 = vld.sshfl [vmem:[#allocation1 + $0x38] sm:$0xff pattern:$0x75316420]
    %vm77 = vcmask 23552
    %v79 = vsel %vm77, %v19, 0
    %vm81 = vcmask 1042432
    %v82 = vsel %vm81, %v69, 0
    %v84 = vsel %vm81, %v70, 0
    %v86 = vsel %vm81, %v71, 0
    %v88 = vsel %vm81, %v72, 0
    %v90 = vsel %vm81, %v73, 0
    %v92 = vsel %vm81, %v74, 0
    %v94 = vsel %vm81, %v75, 0
    %v96 = vsel %vm81, %v76, 0
    %98 = vmatpush.msra.mxu0 0.0
    %99 = vmatpush.msra.mxu0 0.0
    %100 = vmatpush.msra.mxu0 0.0
    %101 = vmatpush.msra.mxu0 0.0
    %102 = vmatpush.msra.mxu0 0.0
    %103 = vmatpush.msra.mxu0 0.0
    %104 = vmatpush.msra.mxu0 0.0
    %105 = vmatpush.msra.mxu0 0.0
    %106 = vmatpush.msra.mxu0 0.0
    %107 = vmatpush.msra.mxu0 0.0
    %108 = vmatpush.msra.mxu0 0.0
    %109 = vmatpush.msra.mxu0 0.0
    %110 = vmatpush.msra.mxu0 0.0
    %111 = vmatpush.msra.mxu0 0.0
    %112 = vmatpush.msra.mxu0 0.0
    %113 = vmatpush.msra.mxu0 %v82
    %114 = vmatmul.f32.gmra.mxu0 %v79
    %v115 = vpop.f32.mrf.mxu0
    %v116 = vadd.f32 %v56, %v115
    %117 = vdwg.mxu0
    %118 = vmatpush.msra.mxu0 0.0
    %119 = vmatpush.msra.mxu0 0.0
    %120 = vmatpush.msra.mxu0 0.0
    %121 = vmatpush.msra.mxu0 0.0
    %122 = vmatpush.msra.mxu0 0.0
    %123 = vmatpush.msra.mxu0 0.0
    %124 = vmatpush.msra.mxu0 0.0
    %125 = vmatpush.msra.mxu0 0.0
    %126 = vmatpush.msra.mxu0 0.0
    %127 = vmatpush.msra.mxu0 0.0
    %128 = vmatpush.msra.mxu0 0.0
    %129 = vmatpush.msra.mxu0 0.0
    %130 = vmatpush.msra.mxu0 0.0
    %131 = vmatpush.msra.mxu0 0.0
    %132 = vmatpush.msra.mxu0 0.0
    %133 = vmatpush.msra.mxu0 %v84
    %134 = vmatmul.f32.gmra.mxu0 %v79
    %v135 = vpop.f32.mrf.mxu0
    %v136 = vadd.f32 %v56, %v135
    %137 = vdwg.mxu0
    %138 = vmatpush.msra.mxu0 0.0
    %139 = vmatpush.msra.mxu0 0.0
    %140 = vmatpush.msra.mxu0 0.0
    %141 = vmatpush.msra.mxu0 0.0
    %142 = vmatpush.msra.mxu0 0.0
    %143 = vmatpush.msra.mxu0 0.0
    %144 = vmatpush.msra.mxu0 0.0
    %145 = vmatpush.msra.mxu0 0.0
    %146 = vmatpush.msra.mxu0 0.0
    %147 = vmatpush.msra.mxu0 0.0
    %148 = vmatpush.msra.mxu0 0.0
    %149 = vmatpush.msra.mxu0 0.0
    %150 = vmatpush.msra.mxu0 0.0
    %151 = vmatpush.msra.mxu0 0.0
    %152 = vmatpush.msra.mxu0 0.0
    %153 = vmatpush.msra.mxu0 %v86
    %154 = vmatmul.f32.gmra.mxu0 %v79
    %v155 = vpop.f32.mrf.mxu0
    %v156 = vadd.f32 %v56, %v155
    %157 = vdwg.mxu0
    %158 = vmatpush.msra.mxu0 0.0
    %159 = vmatpush.msra.mxu0 0.0
    %160 = vmatpush.msra.mxu0 0.0
    %161 = vmatpush.msra.mxu0 0.0
    %162 = vmatpush.msra.mxu0 0.0
    %163 = vmatpush.msra.mxu0 0.0
    %164 = vmatpush.msra.mxu0 0.0
    %165 = vmatpush.msra.mxu0 0.0
    %166 = vmatpush.msra.mxu0 0.0
    %167 = vmatpush.msra.mxu0 0.0
    %168 = vmatpush.msra.mxu0 0.0
    %169 = vmatpush.msra.mxu0 0.0
    %170 = vmatpush.msra.mxu0 0.0
    %171 = vmatpush.msra.mxu0 0.0
    %172 = vmatpush.msra.mxu0 0.0
    %173 = vmatpush.msra.mxu0 %v88
    %174 = vmatmul.f32.gmra.mxu0 %v79
    %v175 = vpop.f32.mrf.mxu0
    %v176 = vadd.f32 %v56, %v175
    %177 = vdwg.mxu0
    %178 = vmatpush.msra.mxu0 0.0
    %179 = vmatpush.msra.mxu0 0.0
    %180 = vmatpush.msra.mxu0 0.0
    %181 = vmatpush.msra.mxu0 0.0
    %182 = vmatpush.msra.mxu0 0.0
    %183 = vmatpush.msra.mxu0 0.0
    %184 = vmatpush.msra.mxu0 0.0
    %185 = vmatpush.msra.mxu0 0.0
    %186 = vmatpush.msra.mxu0 0.0
    %187 = vmatpush.msra.mxu0 0.0
    %188 = vmatpush.msra.mxu0 0.0
    %189 = vmatpush.msra.mxu0 0.0
    %190 = vmatpush.msra.mxu0 0.0
    %191 = vmatpush.msra.mxu0 0.0
    %192 = vmatpush.msra.mxu0 0.0
    %193 = vmatpush.msra.mxu0 %v90
    %194 = vmatmul.f32.gmra.mxu0 %v79
    %v195 = vpop.f32.mrf.mxu0
    %v196 = vadd.f32 %v56, %v195
    %197 = vdwg.mxu0
    %198 = vmatpush.msra.mxu0 0.0
    %199 = vmatpush.msra.mxu0 0.0
    %200 = vmatpush.msra.mxu0 0.0
    %201 = vmatpush.msra.mxu0 0.0
    %202 = vmatpush.msra.mxu0 0.0
    %203 = vmatpush.msra.mxu0 0.0
    %204 = vmatpush.msra.mxu0 0.0
    %205 = vmatpush.msra.mxu0 0.0
    %206 = vmatpush.msra.mxu0 0.0
    %207 = vmatpush.msra.mxu0 0.0
    %208 = vmatpush.msra.mxu0 0.0
    %209 = vmatpush.msra.mxu0 0.0
    %210 = vmatpush.msra.mxu0 0.0
    %211 = vmatpush.msra.mxu0 0.0
    %212 = vmatpush.msra.mxu0 0.0
    %213 = vmatpush.msra.mxu0 %v92
    %214 = vmatmul.f32.gmra.mxu0 %v79
    %v215 = vpop.f32.mrf.mxu0
    %v216 = vadd.f32 %v56, %v215
    %217 = vdwg.mxu0
    %218 = vmatpush.msra.mxu0 0.0
    %219 = vmatpush.msra.mxu0 0.0
    %220 = vmatpush.msra.mxu0 0.0
    %221 = vmatpush.msra.mxu0 0.0
    %222 = vmatpush.msra.mxu0 0.0
    %223 = vmatpush.msra.mxu0 0.0
    %224 = vmatpush.msra.mxu0 0.0
    %225 = vmatpush.msra.mxu0 0.0
    %226 = vmatpush.msra.mxu0 0.0
    %227 = vmatpush.msra.mxu0 0.0
    %228 = vmatpush.msra.mxu0 0.0
    %229 = vmatpush.msra.mxu0 0.0
    %230 = vmatpush.msra.mxu0 0.0
    %231 = vmatpush.msra.mxu0 0.0
    %232 = vmatpush.msra.mxu0 0.0
    %233 = vmatpush.msra.mxu0 %v94
    %234 = vmatmul.f32.gmra.mxu0 %v79
    %v235 = vpop.f32.mrf.mxu0
    %v236 = vadd.f32 %v56, %v235
    %237 = vdwg.mxu0
    %238 = vmatpush.msra.mxu0 0.0
    %239 = vmatpush.msra.mxu0 0.0
    %240 = vmatpush.msra.mxu0 0.0
    %241 = vmatpush.msra.mxu0 0.0
    %242 = vmatpush.msra.mxu0 0.0
    %243 = vmatpush.msra.mxu0 0.0
    %244 = vmatpush.msra.mxu0 0.0
    %245 = vmatpush.msra.mxu0 0.0
    %246 = vmatpush.msra.mxu0 0.0
    %247 = vmatpush.msra.mxu0 0.0
    %248 = vmatpush.msra.mxu0 0.0
    %249 = vmatpush.msra.mxu0 0.0
    %250 = vmatpush.msra.mxu0 0.0
    %251 = vmatpush.msra.mxu0 0.0
    %252 = vmatpush.msra.mxu0 0.0
    %253 = vmatpush.msra.mxu0 %v96
    %254 = vmatmul.f32.gmra.mxu0 %v79
    %v255 = vpop.f32.mrf.mxu0
    %v256 = vadd.f32 %v56, %v255
    %257 = vdwg.mxu0
    %v258 = vtanh.pop %v116
    %v259 = vtanh.pop %v136
    %v260 = vtanh.pop %v156
    %v261 = vtanh.pop %v176
    %v262 = vtanh.pop %v196
    %v263 = vtanh.pop %v216
    %v264 = vtanh.pop %v236
    %v265 = vtanh.pop %v256
    %v266 = vadd.f32 %v258, %v259
    %v267 = vadd.f32 %v266, %v260
    %v268 = vadd.f32 %v267, %v261
    %v269 = vadd.f32 %v268, %v262
    %v270 = vadd.f32 %v269, %v263
    %v271 = vadd.f32 %v270, %v264
    %v272 = vadd.f32 %v271, %v265
    %273 = vadd.xlane.f32.xlu0 %v272
    %v274 = vpop.xlane.xlu0 %273
    %v275 = vmul.f32 %v274, 0.0009765625
    %v276 = vmul.f32 %v258, %v258
    %v277 = vmul.f32 %v259, %v259
    %v278 = vmul.f32 %v260, %v260
    %v279 = vmul.f32 %v261, %v261
    %v280 = vmul.f32 %v262, %v262
    %v281 = vmul.f32 %v263, %v263
    %v282 = vmul.f32 %v264, %v264
    %v283 = vmul.f32 %v265, %v265
    %v284 = vadd.f32 %v276, %v277
    %v285 = vadd.f32 %v284, %v278
    %v286 = vadd.f32 %v285, %v279
    %v287 = vadd.f32 %v286, %v280
    %v288 = vadd.f32 %v287, %v281
    %v289 = vadd.f32 %v288, %v282
    %v290 = vadd.f32 %v289, %v283
    %291 = vadd.xlane.f32.xlu0 %v290
    %v292 = vpop.xlane.xlu0 %291
    %v293 = vmul.f32 %v292, 0.0009765625
    %v294 = vmul.f32 %v275, %v275
    %v295 = vsub.f32 %v293, %v294
    %v296 = vadd.f32 %v295, 1e-05
    %v297 = vrsqrt.pop %v296
    %v298 = vmul.f32 %v297, %v296
    %v299 = vmul.f32 %v298, %v297
    %v300 = vmul.f32 0.5, %v299
    %v301 = vsub.f32 1.5, %v300
    %v302 = vmul.f32 %v297, %v301
    %vm303 = vweird.f32 %v296
    %vm304 = vweird.f32 %v297
    %vm305 = vmor %vm303, %vm304
    %v306 = vsel %vm305, %v297, %v302
    %v307 = vmul.f32 %v38, %v306
    %v308 = vsub.f32 %v258, %v275
    %v309 = vsub.f32 %v259, %v275
    %v310 = vsub.f32 %v260, %v275
    %v311 = vsub.f32 %v261, %v275
    %v312 = vsub.f32 %v262, %v275
    %v313 = vsub.f32 %v263, %v275
    %v314 = vsub.f32 %v264, %v275
    %v315 = vsub.f32 %v265, %v275
    %317 = vset.pattern.permute.xlu0 0
    %318 = vperm.xlu0 %317, %v307
    %v319 = vpop.permute.xlu0 %318
    %v321 = vmul.f32 %v308, %v319
    %v322 = vmul.f32 %v309, %v319
    %v323 = vmul.f32 %v310, %v319
    %v324 = vmul.f32 %v311, %v319
    %v325 = vmul.f32 %v312, %v319
    %v326 = vmul.f32 %v313, %v319
    %v327 = vmul.f32 %v314, %v319
    %v328 = vmul.f32 %v315, %v319
    %330 = vset.pattern.permute.xlu0 0
    %331 = vperm.xlu0 %330, %v46
    %v332 = vpop.permute.xlu0 %331
    %v334 = vadd.f32 %v321, %v332
    %v335 = vadd.f32 %v322, %v332
    %v336 = vadd.f32 %v323, %v332
    %v337 = vadd.f32 %v324, %v332
    %v338 = vadd.f32 %v325, %v332
    %v339 = vadd.f32 %v326, %v332
    %v340 = vadd.f32 %v327, %v332
    %v341 = vadd.f32 %v328, %v332
    %343 = vset.pattern.permute.xlu0 0
    %344 = vperm.xlu0 %343, %v30
    %v345 = vpop.permute.xlu0 %344
    %vm347 = vcmask 64512
    %v349 = vsel %vm347, %v21, 0
    %351 = vmatpush.msra.mxu0 0.0
    %352 = vmatpush.msra.mxu0 0.0
    %353 = vmatpush.msra.mxu0 0.0
    %354 = vmatpush.msra.mxu0 0.0
    %355 = vmatpush.msra.mxu0 0.0
    %356 = vmatpush.msra.mxu0 0.0
    %357 = vmatpush.msra.mxu0 0.0
    %358 = vmatpush.msra.mxu0 0.0
    %359 = vmatpush.msra.mxu0 0.0
    %360 = vmatpush.msra.mxu0 0.0
    %361 = vmatpush.msra.mxu0 0.0
    %362 = vmatpush.msra.mxu0 0.0
    %363 = vmatpush.msra.mxu0 0.0
    %364 = vmatpush.msra.mxu0 0.0
    %365 = vmatpush.msra.mxu0 0.0
    %366 = vmatpush.msra.mxu0 %v334
    %367 = vmatmul.f32.gmra.mxu0 %v349
    %v368 = vpop.f32.mrf.mxu0
    %v369 = vadd.f32 %v345, %v368
    %370 = vdwg.mxu0
    %371 = vmatpush.msra.mxu0 0.0
    %372 = vmatpush.msra.mxu0 0.0
    %373 = vmatpush.msra.mxu0 0.0
    %374 = vmatpush.msra.mxu0 0.0
    %375 = vmatpush.msra.mxu0 0.0
    %376 = vmatpush.msra.mxu0 0.0
    %377 = vmatpush.msra.mxu0 0.0
    %378 = vmatpush.msra.mxu0 0.0
    %379 = vmatpush.msra.mxu0 0.0
    %380 = vmatpush.msra.mxu0 0.0
    %381 = vmatpush.msra.mxu0 0.0
    %382 = vmatpush.msra.mxu0 0.0
    %383 = vmatpush.msra.mxu0 0.0
    %384 = vmatpush.msra.mxu0 0.0
    %385 = vmatpush.msra.mxu0 0.0
    %386 = vmatpush.msra.mxu0 %v335
    %387 = vmatmul.f32.gmra.mxu0 %v349
    %v388 = vpop.f32.mrf.mxu0
    %v389 = vadd.f32 %v345, %v388
    %390 = vdwg.mxu0
    %391 = vmatpush.msra.mxu0 0.0
    %392 = vmatpush.msra.mxu0 0.0
    %393 = vmatpush.msra.mxu0 0.0
    %394 = vmatpush.msra.mxu0 0.0
    %395 = vmatpush.msra.mxu0 0.0
    %396 = vmatpush.msra.mxu0 0.0
    %397 = vmatpush.msra.mxu0 0.0
    %398 = vmatpush.msra.mxu0 0.0
    %399 = vmatpush.msra.mxu0 0.0
    %400 = vmatpush.msra.mxu0 0.0
    %401 = vmatpush.msra.mxu0 0.0
    %402 = vmatpush.msra.mxu0 0.0
    %403 = vmatpush.msra.mxu0 0.0
    %404 = vmatpush.msra.mxu0 0.0
    %405 = vmatpush.msra.mxu0 0.0
    %406 = vmatpush.msra.mxu0 %v336
    %407 = vmatmul.f32.gmra.mxu0 %v349
    %v408 = vpop.f32.mrf.mxu0
    %v409 = vadd.f32 %v345, %v408
    %410 = vdwg.mxu0
    %411 = vmatpush.msra.mxu0 0.0
    %412 = vmatpush.msra.mxu0 0.0
    %413 = vmatpush.msra.mxu0 0.0
    %414 = vmatpush.msra.mxu0 0.0
    %415 = vmatpush.msra.mxu0 0.0
    %416 = vmatpush.msra.mxu0 0.0
    %417 = vmatpush.msra.mxu0 0.0
    %418 = vmatpush.msra.mxu0 0.0
    %419 = vmatpush.msra.mxu0 0.0
    %420 = vmatpush.msra.mxu0 0.0
    %421 = vmatpush.msra.mxu0 0.0
    %422 = vmatpush.msra.mxu0 0.0
    %423 = vmatpush.msra.mxu0 0.0
    %424 = vmatpush.msra.mxu0 0.0
    %425 = vmatpush.msra.mxu0 0.0
    %426 = vmatpush.msra.mxu0 %v337
    %427 = vmatmul.f32.gmra.mxu0 %v349
    %v428 = vpop.f32.mrf.mxu0
    %v429 = vadd.f32 %v345, %v428
    %430 = vdwg.mxu0
    %431 = vmatpush.msra.mxu0 0.0
    %432 = vmatpush.msra.mxu0 0.0
    %433 = vmatpush.msra.mxu0 0.0
    %434 = vmatpush.msra.mxu0 0.0
    %435 = vmatpush.msra.mxu0 0.0
    %436 = vmatpush.msra.mxu0 0.0
    %437 = vmatpush.msra.mxu0 0.0
    %438 = vmatpush.msra.mxu0 0.0
    %439 = vmatpush.msra.mxu0 0.0
    %440 = vmatpush.msra.mxu0 0.0
    %441 = vmatpush.msra.mxu0 0.0
    %442 = vmatpush.msra.mxu0 0.0
    %443 = vmatpush.msra.mxu0 0.0
    %444 = vmatpush.msra.mxu0 0.0
    %445 = vmatpush.msra.mxu0 0.0
    %446 = vmatpush.msra.mxu0 %v338
    %447 = vmatmul.f32.gmra.mxu0 %v349
    %v448 = vpop.f32.mrf.mxu0
    %v449 = vadd.f32 %v345, %v448
    %450 = vdwg.mxu0
    %451 = vmatpush.msra.mxu0 0.0
    %452 = vmatpush.msra.mxu0 0.0
    %453 = vmatpush.msra.mxu0 0.0
    %454 = vmatpush.msra.mxu0 0.0
    %455 = vmatpush.msra.mxu0 0.0
    %456 = vmatpush.msra.mxu0 0.0
    %457 = vmatpush.msra.mxu0 0.0
    %458 = vmatpush.msra.mxu0 0.0
    %459 = vmatpush.msra.mxu0 0.0
    %460 = vmatpush.msra.mxu0 0.0
    %461 = vmatpush.msra.mxu0 0.0
    %462 = vmatpush.msra.mxu0 0.0
    %463 = vmatpush.msra.mxu0 0.0
    %464 = vmatpush.msra.mxu0 0.0
    %465 = vmatpush.msra.mxu0 0.0
    %466 = vmatpush.msra.mxu0 %v339
    %467 = vmatmul.f32.gmra.mxu0 %v349
    %v468 = vpop.f32.mrf.mxu0
    %v469 = vadd.f32 %v345, %v468
    %470 = vdwg.mxu0
    %471 = vmatpush.msra.mxu0 0.0
    %472 = vmatpush.msra.mxu0 0.0
    %473 = vmatpush.msra.mxu0 0.0
    %474 = vmatpush.msra.mxu0 0.0
    %475 = vmatpush.msra.mxu0 0.0
    %476 = vmatpush.msra.mxu0 0.0
    %477 = vmatpush.msra.mxu0 0.0
    %478 = vmatpush.msra.mxu0 0.0
    %479 = vmatpush.msra.mxu0 0.0
    %480 = vmatpush.msra.mxu0 0.0
    %481 = vmatpush.msra.mxu0 0.0
    %482 = vmatpush.msra.mxu0 0.0
    %483 = vmatpush.msra.mxu0 0.0
    %484 = vmatpush.msra.mxu0 0.0
    %485 = vmatpush.msra.mxu0 0.0
    %486 = vmatpush.msra.mxu0 %v340
    %487 = vmatmul.f32.gmra.mxu0 %v349
    %v488 = vpop.f32.mrf.mxu0
    %v489 = vadd.f32 %v345, %v488
    %490 = vdwg.mxu0
    %491 = vmatpush.msra.mxu0 0.0
    %492 = vmatpush.msra.mxu0 0.0
    %493 = vmatpush.msra.mxu0 0.0
    %494 = vmatpush.msra.mxu0 0.0
    %495 = vmatpush.msra.mxu0 0.0
    %496 = vmatpush.msra.mxu0 0.0
    %497 = vmatpush.msra.mxu0 0.0
    %498 = vmatpush.msra.mxu0 0.0
    %499 = vmatpush.msra.mxu0 0.0
    %500 = vmatpush.msra.mxu0 0.0
    %501 = vmatpush.msra.mxu0 0.0
    %502 = vmatpush.msra.mxu0 0.0
    %503 = vmatpush.msra.mxu0 0.0
    %504 = vmatpush.msra.mxu0 0.0
    %505 = vmatpush.msra.mxu0 0.0
    %506 = vmatpush.msra.mxu0 %v341
    %507 = vmatmul.f32.gmra.mxu0 %v349
    %v508 = vpop.f32.mrf.mxu0
    %v509 = vadd.f32 %v345, %v508
    %510 = vdwg.mxu0
    %v511 = vtanh.pop %v369
    %v512 = vtanh.pop %v389
    %v513 = vtanh.pop %v409
    %v514 = vtanh.pop %v429
    %v515 = vtanh.pop %v449
    %v516 = vtanh.pop %v469
    %v517 = vtanh.pop %v489
    %v518 = vtanh.pop %v509
    %v519 = vadd.f32 %v511, %v512
    %v520 = vadd.f32 %v519, %v513
    %v521 = vadd.f32 %v520, %v514
    %v522 = vadd.f32 %v521, %v515
    %v523 = vadd.f32 %v522, %v516
    %v524 = vadd.f32 %v523, %v517
    %v525 = vadd.f32 %v524, %v518
    %526 = vadd.xlane.f32.xlu0 %v525
    %v527 = vpop.xlane.xlu0 %526
    %v528 = vmul.f32 %v527, 0.0009765625
    %v529 = vmul.f32 %v511, %v511
    %v530 = vmul.f32 %v512, %v512
    %v531 = vmul.f32 %v513, %v513
    %v532 = vmul.f32 %v514, %v514
    %v533 = vmul.f32 %v515, %v515
    %v534 = vmul.f32 %v516, %v516
    %v535 = vmul.f32 %v517, %v517
    %v536 = vmul.f32 %v518, %v518
    %v537 = vadd.f32 %v529, %v530
    %v538 = vadd.f32 %v537, %v531
    %v539 = vadd.f32 %v538, %v532
    %v540 = vadd.f32 %v539, %v533
    %v541 = vadd.f32 %v540, %v534
    %v542 = vadd.f32 %v541, %v535
    %v543 = vadd.f32 %v542, %v536
    %544 = vadd.xlane.f32.xlu0 %v543
    %v545 = vpop.xlane.xlu0 %544
    %v546 = vmul.f32 %v545, 0.0009765625
    %v547 = vmul.f32 %v528, %v528
    %v548 = vsub.f32 %v546, %v547
    %v549 = vadd.f32 %v548, 1e-05
    %v550 = vrsqrt.pop %v549
    %v551 = vmul.f32 %v550, %v549
    %v552 = vmul.f32 %v551, %v550
    %v553 = vmul.f32 0.5, %v552
    %v554 = vsub.f32 1.5, %v553
    %v555 = vmul.f32 %v550, %v554
    %vm556 = vweird.f32 %v549
    %vm557 = vweird.f32 %v550
    %vm558 = vmor %vm556, %vm557
    %v559 = vsel %vm558, %v550, %v555
    %v560 = vmul.f32 %v40, %v559
    %v561 = vsub.f32 %v511, %v528
    %v562 = vsub.f32 %v512, %v528
    %v563 = vsub.f32 %v513, %v528
    %v564 = vsub.f32 %v514, %v528
    %v565 = vsub.f32 %v515, %v528
    %v566 = vsub.f32 %v516, %v528
    %v567 = vsub.f32 %v517, %v528
    %v568 = vsub.f32 %v518, %v528
    %570 = vset.pattern.permute.xlu0 0
    %571 = vperm.xlu0 %570, %v560
    %v572 = vpop.permute.xlu0 %571
    %v574 = vmul.f32 %v561, %v572
    %v575 = vmul.f32 %v562, %v572
    %v576 = vmul.f32 %v563, %v572
    %v577 = vmul.f32 %v564, %v572
    %v578 = vmul.f32 %v565, %v572
    %v579 = vmul.f32 %v566, %v572
    %v580 = vmul.f32 %v567, %v572
    %v581 = vmul.f32 %v568, %v572
    %583 = vset.pattern.permute.xlu0 0
    %584 = vperm.xlu0 %583, %v48
    %v585 = vpop.permute.xlu0 %584
    %v587 = vadd.f32 %v574, %v585
    %v588 = vadd.f32 %v575, %v585
    %v589 = vadd.f32 %v576, %v585
    %v590 = vadd.f32 %v577, %v585
    %v591 = vadd.f32 %v578, %v585
    %v592 = vadd.f32 %v579, %v585
    %v593 = vadd.f32 %v580, %v585
    %v594 = vadd.f32 %v581, %v585
    %596 = vset.pattern.permute.xlu0 0
    %597 = vperm.xlu0 %596, %v32
    %v598 = vpop.permute.xlu0 %597
    %v601 = vsel %vm347, %v23, 0
    %603 = vmatpush.msra.mxu0 0.0
    %604 = vmatpush.msra.mxu0 0.0
    %605 = vmatpush.msra.mxu0 0.0
    %606 = vmatpush.msra.mxu0 0.0
    %607 = vmatpush.msra.mxu0 0.0
    %608 = vmatpush.msra.mxu0 0.0
    %609 = vmatpush.msra.mxu0 0.0
    %610 = vmatpush.msra.mxu0 0.0
    %611 = vmatpush.msra.mxu0 0.0
    %612 = vmatpush.msra.mxu0 0.0
    %613 = vmatpush.msra.mxu0 0.0
    %614 = vmatpush.msra.mxu0 0.0
    %615 = vmatpush.msra.mxu0 0.0
    %616 = vmatpush.msra.mxu0 0.0
    %617 = vmatpush.msra.mxu0 0.0
    %618 = vmatpush.msra.mxu0 %v587
    %619 = vmatmul.f32.gmra.mxu0 %v601
    %v620 = vpop.f32.mrf.mxu0
    %v621 = vadd.f32 %v598, %v620
    %622 = vdwg.mxu0
    %623 = vmatpush.msra.mxu0 0.0
    %624 = vmatpush.msra.mxu0 0.0
    %625 = vmatpush.msra.mxu0 0.0
    %626 = vmatpush.msra.mxu0 0.0
    %627 = vmatpush.msra.mxu0 0.0
    %628 = vmatpush.msra.mxu0 0.0
    %629 = vmatpush.msra.mxu0 0.0
    %630 = vmatpush.msra.mxu0 0.0
    %631 = vmatpush.msra.mxu0 0.0
    %632 = vmatpush.msra.mxu0 0.0
    %633 = vmatpush.msra.mxu0 0.0
    %634 = vmatpush.msra.mxu0 0.0
    %635 = vmatpush.msra.mxu0 0.0
    %636 = vmatpush.msra.mxu0 0.0
    %637 = vmatpush.msra.mxu0 0.0
    %638 = vmatpush.msra.mxu0 %v588
    %639 = vmatmul.f32.gmra.mxu0 %v601
    %v640 = vpop.f32.mrf.mxu0
    %v641 = vadd.f32 %v598, %v640
    %642 = vdwg.mxu0
    %643 = vmatpush.msra.mxu0 0.0
    %644 = vmatpush.msra.mxu0 0.0
    %645 = vmatpush.msra.mxu0 0.0
    %646 = vmatpush.msra.mxu0 0.0
    %647 = vmatpush.msra.mxu0 0.0
    %648 = vmatpush.msra.mxu0 0.0
    %649 = vmatpush.msra.mxu0 0.0
    %650 = vmatpush.msra.mxu0 0.0
    %651 = vmatpush.msra.mxu0 0.0
    %652 = vmatpush.msra.mxu0 0.0
    %653 = vmatpush.msra.mxu0 0.0
    %654 = vmatpush.msra.mxu0 0.0
    %655 = vmatpush.msra.mxu0 0.0
    %656 = vmatpush.msra.mxu0 0.0
    %657 = vmatpush.msra.mxu0 0.0
    %658 = vmatpush.msra.mxu0 %v589
    %659 = vmatmul.f32.gmra.mxu0 %v601
    %v660 = vpop.f32.mrf.mxu0
    %v661 = vadd.f32 %v598, %v660
    %662 = vdwg.mxu0
    %663 = vmatpush.msra.mxu0 0.0
    %664 = vmatpush.msra.mxu0 0.0
    %665 = vmatpush.msra.mxu0 0.0
    %666 = vmatpush.msra.mxu0 0.0
    %667 = vmatpush.msra.mxu0 0.0
    %668 = vmatpush.msra.mxu0 0.0
    %669 = vmatpush.msra.mxu0 0.0
    %670 = vmatpush.msra.mxu0 0.0
    %671 = vmatpush.msra.mxu0 0.0
    %672 = vmatpush.msra.mxu0 0.0
    %673 = vmatpush.msra.mxu0 0.0
    %674 = vmatpush.msra.mxu0 0.0
    %675 = vmatpush.msra.mxu0 0.0
    %676 = vmatpush.msra.mxu0 0.0
    %677 = vmatpush.msra.mxu0 0.0
    %678 = vmatpush.msra.mxu0 %v590
    %679 = vmatmul.f32.gmra.mxu0 %v601
    %v680 = vpop.f32.mrf.mxu0
    %v681 = vadd.f32 %v598, %v680
    %682 = vdwg.mxu0
    %683 = vmatpush.msra.mxu0 0.0
    %684 = vmatpush.msra.mxu0 0.0
    %685 = vmatpush.msra.mxu0 0.0
    %686 = vmatpush.msra.mxu0 0.0
    %687 = vmatpush.msra.mxu0 0.0
    %688 = vmatpush.msra.mxu0 0.0
    %689 = vmatpush.msra.mxu0 0.0
    %690 = vmatpush.msra.mxu0 0.0
    %691 = vmatpush.msra.mxu0 0.0
    %692 = vmatpush.msra.mxu0 0.0
    %693 = vmatpush.msra.mxu0 0.0
    %694 = vmatpush.msra.mxu0 0.0
    %695 = vmatpush.msra.mxu0 0.0
    %696 = vmatpush.msra.mxu0 0.0
    %697 = vmatpush.msra.mxu0 0.0
    %698 = vmatpush.msra.mxu0 %v591
    %699 = vmatmul.f32.gmra.mxu0 %v601
    %v700 = vpop.f32.mrf.mxu0
    %v701 = vadd.f32 %v598, %v700
    %702 = vdwg.mxu0
    %703 = vmatpush.msra.mxu0 0.0
    %704 = vmatpush.msra.mxu0 0.0
    %705 = vmatpush.msra.mxu0 0.0
    %706 = vmatpush.msra.mxu0 0.0
    %707 = vmatpush.msra.mxu0 0.0
    %708 = vmatpush.msra.mxu0 0.0
    %709 = vmatpush.msra.mxu0 0.0
    %710 = vmatpush.msra.mxu0 0.0
    %711 = vmatpush.msra.mxu0 0.0
    %712 = vmatpush.msra.mxu0 0.0
    %713 = vmatpush.msra.mxu0 0.0
    %714 = vmatpush.msra.mxu0 0.0
    %715 = vmatpush.msra.mxu0 0.0
    %716 = vmatpush.msra.mxu0 0.0
    %717 = vmatpush.msra.mxu0 0.0
    %718 = vmatpush.msra.mxu0 %v592
    %719 = vmatmul.f32.gmra.mxu0 %v601
    %v720 = vpop.f32.mrf.mxu0
    %v721 = vadd.f32 %v598, %v720
    %722 = vdwg.mxu0
    %723 = vmatpush.msra.mxu0 0.0
    %724 = vmatpush.msra.mxu0 0.0
    %725 = vmatpush.msra.mxu0 0.0
    %726 = vmatpush.msra.mxu0 0.0
    %727 = vmatpush.msra.mxu0 0.0
    %728 = vmatpush.msra.mxu0 0.0
    %729 = vmatpush.msra.mxu0 0.0
    %730 = vmatpush.msra.mxu0 0.0
    %731 = vmatpush.msra.mxu0 0.0
    %732 = vmatpush.msra.mxu0 0.0
    %733 = vmatpush.msra.mxu0 0.0
    %734 = vmatpush.msra.mxu0 0.0
    %735 = vmatpush.msra.mxu0 0.0
    %736 = vmatpush.msra.mxu0 0.0
    %737 = vmatpush.msra.mxu0 0.0
    %738 = vmatpush.msra.mxu0 %v593
    %739 = vmatmul.f32.gmra.mxu0 %v601
    %v740 = vpop.f32.mrf.mxu0
    %v741 = vadd.f32 %v598, %v740
    %742 = vdwg.mxu0
    %743 = vmatpush.msra.mxu0 0.0
    %744 = vmatpush.msra.mxu0 0.0
    %745 = vmatpush.msra.mxu0 0.0
    %746 = vmatpush.msra.mxu0 0.0
    %747 = vmatpush.msra.mxu0 0.0
    %748 = vmatpush.msra.mxu0 0.0
    %749 = vmatpush.msra.mxu0 0.0
    %750 = vmatpush.msra.mxu0 0.0
    %751 = vmatpush.msra.mxu0 0.0
    %752 = vmatpush.msra.mxu0 0.0
    %753 = vmatpush.msra.mxu0 0.0
    %754 = vmatpush.msra.mxu0 0.0
    %755 = vmatpush.msra.mxu0 0.0
    %756 = vmatpush.msra.mxu0 0.0
    %757 = vmatpush.msra.mxu0 0.0
    %758 = vmatpush.msra.mxu0 %v594
    %759 = vmatmul.f32.gmra.mxu0 %v601
    %v760 = vpop.f32.mrf.mxu0
    %v761 = vadd.f32 %v598, %v760
    %762 = vdwg.mxu0
    %v763 = vtanh.pop %v621
    %v764 = vtanh.pop %v641
    %v765 = vtanh.pop %v661
    %v766 = vtanh.pop %v681
    %v767 = vtanh.pop %v701
    %v768 = vtanh.pop %v721
    %v769 = vtanh.pop %v741
    %v770 = vtanh.pop %v761
    %v771 = vadd.f32 %v763, %v764
    %v772 = vadd.f32 %v771, %v765
    %v773 = vadd.f32 %v772, %v766
    %v774 = vadd.f32 %v773, %v767
    %v775 = vadd.f32 %v774, %v768
    %v776 = vadd.f32 %v775, %v769
    %v777 = vadd.f32 %v776, %v770
    %778 = vadd.xlane.f32.xlu0 %v777
    %v779 = vpop.xlane.xlu0 %778
    %v780 = vmul.f32 %v779, 0.0009765625
    %v781 = vmul.f32 %v763, %v763
    %v782 = vmul.f32 %v764, %v764
    %v783 = vmul.f32 %v765, %v765
    %v784 = vmul.f32 %v766, %v766
    %v785 = vmul.f32 %v767, %v767
    %v786 = vmul.f32 %v768, %v768
    %v787 = vmul.f32 %v769, %v769
    %v788 = vmul.f32 %v770, %v770
    %v789 = vadd.f32 %v781, %v782
    %v790 = vadd.f32 %v789, %v783
    %v791 = vadd.f32 %v790, %v784
    %v792 = vadd.f32 %v791, %v785
    %v793 = vadd.f32 %v792, %v786
    %v794 = vadd.f32 %v793, %v787
    %v795 = vadd.f32 %v794, %v788
    %796 = vadd.xlane.f32.xlu0 %v795
    %v797 = vpop.xlane.xlu0 %796
    %v798 = vmul.f32 %v797, 0.0009765625
    %v799 = vmul.f32 %v780, %v780
    %v800 = vsub.f32 %v798, %v799
    %v801 = vadd.f32 %v800, 1e-05
    %v802 = vrsqrt.pop %v801
    %v803 = vmul.f32 %v802, %v801
    %v804 = vmul.f32 %v803, %v802
    %v805 = vmul.f32 0.5, %v804
    %v806 = vsub.f32 1.5, %v805
    %v807 = vmul.f32 %v802, %v806
    %vm808 = vweird.f32 %v801
    %vm809 = vweird.f32 %v802
    %vm810 = vmor %vm808, %vm809
    %v811 = vsel %vm810, %v802, %v807
    %v812 = vmul.f32 %v42, %v811
    %v813 = vsub.f32 %v763, %v780
    %v814 = vsub.f32 %v764, %v780
    %v815 = vsub.f32 %v765, %v780
    %v816 = vsub.f32 %v766, %v780
    %v817 = vsub.f32 %v767, %v780
    %v818 = vsub.f32 %v768, %v780
    %v819 = vsub.f32 %v769, %v780
    %v820 = vsub.f32 %v770, %v780
    %822 = vset.pattern.permute.xlu0 0
    %823 = vperm.xlu0 %822, %v812
    %v824 = vpop.permute.xlu0 %823
    %v826 = vmul.f32 %v813, %v824
    %v827 = vmul.f32 %v814, %v824
    %v828 = vmul.f32 %v815, %v824
    %v829 = vmul.f32 %v816, %v824
    %v830 = vmul.f32 %v817, %v824
    %v831 = vmul.f32 %v818, %v824
    %v832 = vmul.f32 %v819, %v824
    %v833 = vmul.f32 %v820, %v824
    %835 = vset.pattern.permute.xlu0 0
    %836 = vperm.xlu0 %835, %v50
    %v837 = vpop.permute.xlu0 %836
    %v839 = vadd.f32 %v826, %v837
    %v840 = vadd.f32 %v827, %v837
    %v841 = vadd.f32 %v828, %v837
    %v842 = vadd.f32 %v829, %v837
    %v843 = vadd.f32 %v830, %v837
    %v844 = vadd.f32 %v831, %v837
    %v845 = vadd.f32 %v832, %v837
    %v846 = vadd.f32 %v833, %v837
    %848 = vset.pattern.permute.xlu0 0
    %849 = vperm.xlu0 %848, %v34
    %v850 = vpop.permute.xlu0 %849
    %v853 = vsel %vm347, %v25, 0
    %855 = vmatpush.msra.mxu0 0.0
    %856 = vmatpush.msra.mxu0 0.0
    %857 = vmatpush.msra.mxu0 0.0
    %858 = vmatpush.msra.mxu0 0.0
    %859 = vmatpush.msra.mxu0 0.0
    %860 = vmatpush.msra.mxu0 0.0
    %861 = vmatpush.msra.mxu0 0.0
    %862 = vmatpush.msra.mxu0 0.0
    %863 = vmatpush.msra.mxu0 0.0
    %864 = vmatpush.msra.mxu0 0.0
    %865 = vmatpush.msra.mxu0 0.0
    %866 = vmatpush.msra.mxu0 0.0
    %867 = vmatpush.msra.mxu0 0.0
    %868 = vmatpush.msra.mxu0 0.0
    %869 = vmatpush.msra.mxu0 0.0
    %870 = vmatpush.msra.mxu0 %v839
    %871 = vmatmul.f32.gmra.mxu0 %v853
    %v872 = vpop.f32.mrf.mxu0
    %v873 = vadd.f32 %v850, %v872
    %874 = vdwg.mxu0
    %875 = vmatpush.msra.mxu0 0.0
    %876 = vmatpush.msra.mxu0 0.0
    %877 = vmatpush.msra.mxu0 0.0
    %878 = vmatpush.msra.mxu0 0.0
    %879 = vmatpush.msra.mxu0 0.0
    %880 = vmatpush.msra.mxu0 0.0
    %881 = vmatpush.msra.mxu0 0.0
    %882 = vmatpush.msra.mxu0 0.0
    %883 = vmatpush.msra.mxu0 0.0
    %884 = vmatpush.msra.mxu0 0.0
    %885 = vmatpush.msra.mxu0 0.0
    %886 = vmatpush.msra.mxu0 0.0
    %887 = vmatpush.msra.mxu0 0.0
    %888 = vmatpush.msra.mxu0 0.0
    %889 = vmatpush.msra.mxu0 0.0
    %890 = vmatpush.msra.mxu0 %v840
    %891 = vmatmul.f32.gmra.mxu0 %v853
    %v892 = vpop.f32.mrf.mxu0
    %v893 = vadd.f32 %v850, %v892
    %894 = vdwg.mxu0
    %895 = vmatpush.msra.mxu0 0.0
    %896 = vmatpush.msra.mxu0 0.0
    %897 = vmatpush.msra.mxu0 0.0
    %898 = vmatpush.msra.mxu0 0.0
    %899 = vmatpush.msra.mxu0 0.0
    %900 = vmatpush.msra.mxu0 0.0
    %901 = vmatpush.msra.mxu0 0.0
    %902 = vmatpush.msra.mxu0 0.0
    %903 = vmatpush.msra.mxu0 0.0
    %904 = vmatpush.msra.mxu0 0.0
    %905 = vmatpush.msra.mxu0 0.0
    %906 = vmatpush.msra.mxu0 0.0
    %907 = vmatpush.msra.mxu0 0.0
    %908 = vmatpush.msra.mxu0 0.0
    %909 = vmatpush.msra.mxu0 0.0
    %910 = vmatpush.msra.mxu0 %v841
    %911 = vmatmul.f32.gmra.mxu0 %v853
    %v912 = vpop.f32.mrf.mxu0
    %v913 = vadd.f32 %v850, %v912
    %914 = vdwg.mxu0
    %915 = vmatpush.msra.mxu0 0.0
    %916 = vmatpush.msra.mxu0 0.0
    %917 = vmatpush.msra.mxu0 0.0
    %918 = vmatpush.msra.mxu0 0.0
    %919 = vmatpush.msra.mxu0 0.0
    %920 = vmatpush.msra.mxu0 0.0
    %921 = vmatpush.msra.mxu0 0.0
    %922 = vmatpush.msra.mxu0 0.0
    %923 = vmatpush.msra.mxu0 0.0
    %924 = vmatpush.msra.mxu0 0.0
    %925 = vmatpush.msra.mxu0 0.0
    %926 = vmatpush.msra.mxu0 0.0
    %927 = vmatpush.msra.mxu0 0.0
    %928 = vmatpush.msra.mxu0 0.0
    %929 = vmatpush.msra.mxu0 0.0
    %930 = vmatpush.msra.mxu0 %v842
    %931 = vmatmul.f32.gmra.mxu0 %v853
    %v932 = vpop.f32.mrf.mxu0
    %v933 = vadd.f32 %v850, %v932
    %934 = vdwg.mxu0
    %935 = vmatpush.msra.mxu0 0.0
    %936 = vmatpush.msra.mxu0 0.0
    %937 = vmatpush.msra.mxu0 0.0
    %938 = vmatpush.msra.mxu0 0.0
    %939 = vmatpush.msra.mxu0 0.0
    %940 = vmatpush.msra.mxu0 0.0
    %941 = vmatpush.msra.mxu0 0.0
    %942 = vmatpush.msra.mxu0 0.0
    %943 = vmatpush.msra.mxu0 0.0
    %944 = vmatpush.msra.mxu0 0.0
    %945 = vmatpush.msra.mxu0 0.0
    %946 = vmatpush.msra.mxu0 0.0
    %947 = vmatpush.msra.mxu0 0.0
    %948 = vmatpush.msra.mxu0 0.0
    %949 = vmatpush.msra.mxu0 0.0
    %950 = vmatpush.msra.mxu0 %v843
    %951 = vmatmul.f32.gmra.mxu0 %v853
    %v952 = vpop.f32.mrf.mxu0
    %v953 = vadd.f32 %v850, %v952
    %954 = vdwg.mxu0
    %955 = vmatpush.msra.mxu0 0.0
    %956 = vmatpush.msra.mxu0 0.0
    %957 = vmatpush.msra.mxu0 0.0
    %958 = vmatpush.msra.mxu0 0.0
    %959 = vmatpush.msra.mxu0 0.0
    %960 = vmatpush.msra.mxu0 0.0
    %961 = vmatpush.msra.mxu0 0.0
    %962 = vmatpush.msra.mxu0 0.0
    %963 = vmatpush.msra.mxu0 0.0
    %964 = vmatpush.msra.mxu0 0.0
    %965 = vmatpush.msra.mxu0 0.0
    %966 = vmatpush.msra.mxu0 0.0
    %967 = vmatpush.msra.mxu0 0.0
    %968 = vmatpush.msra.mxu0 0.0
    %969 = vmatpush.msra.mxu0 0.0
    %970 = vmatpush.msra.mxu0 %v844
    %971 = vmatmul.f32.gmra.mxu0 %v853
    %v972 = vpop.f32.mrf.mxu0
    %v973 = vadd.f32 %v850, %v972
    %974 = vdwg.mxu0
    %975 = vmatpush.msra.mxu0 0.0
    %976 = vmatpush.msra.mxu0 0.0
    %977 = vmatpush.msra.mxu0 0.0
    %978 = vmatpush.msra.mxu0 0.0
    %979 = vmatpush.msra.mxu0 0.0
    %980 = vmatpush.msra.mxu0 0.0
    %981 = vmatpush.msra.mxu0 0.0
    %982 = vmatpush.msra.mxu0 0.0
    %983 = vmatpush.msra.mxu0 0.0
    %984 = vmatpush.msra.mxu0 0.0
    %985 = vmatpush.msra.mxu0 0.0
    %986 = vmatpush.msra.mxu0 0.0
    %987 = vmatpush.msra.mxu0 0.0
    %988 = vmatpush.msra.mxu0 0.0
    %989 = vmatpush.msra.mxu0 0.0
    %990 = vmatpush.msra.mxu0 %v845
    %991 = vmatmul.f32.gmra.mxu0 %v853
    %v992 = vpop.f32.mrf.mxu0
    %v993 = vadd.f32 %v850, %v992
    %994 = vdwg.mxu0
    %995 = vmatpush.msra.mxu0 0.0
    %996 = vmatpush.msra.mxu0 0.0
    %997 = vmatpush.msra.mxu0 0.0
    %998 = vmatpush.msra.mxu0 0.0
    %999 = vmatpush.msra.mxu0 0.0
    %1000 = vmatpush.msra.mxu0 0.0
    %1001 = vmatpush.msra.mxu0 0.0
    %1002 = vmatpush.msra.mxu0 0.0
    %1003 = vmatpush.msra.mxu0 0.0
    %1004 = vmatpush.msra.mxu0 0.0
    %1005 = vmatpush.msra.mxu0 0.0
    %1006 = vmatpush.msra.mxu0 0.0
    %1007 = vmatpush.msra.mxu0 0.0
    %1008 = vmatpush.msra.mxu0 0.0
    %1009 = vmatpush.msra.mxu0 0.0
    %1010 = vmatpush.msra.mxu0 %v846
    %1011 = vmatmul.f32.gmra.mxu0 %v853
    %v1012 = vpop.f32.mrf.mxu0
    %v1013 = vadd.f32 %v850, %v1012
    %1014 = vdwg.mxu0
    %v1015 = vtanh.pop %v873
    %v1016 = vtanh.pop %v893
    %v1017 = vtanh.pop %v913
    %v1018 = vtanh.pop %v933
    %v1019 = vtanh.pop %v953
    %v1020 = vtanh.pop %v973
    %v1021 = vtanh.pop %v993
    %v1022 = vtanh.pop %v1013
    %v1023 = vadd.f32 %v1015, %v1016
    %v1024 = vadd.f32 %v1023, %v1017
    %v1025 = vadd.f32 %v1024, %v1018
    %v1026 = vadd.f32 %v1025, %v1019
    %v1027 = vadd.f32 %v1026, %v1020
    %v1028 = vadd.f32 %v1027, %v1021
    %v1029 = vadd.f32 %v1028, %v1022
    %1030 = vadd.xlane.f32.xlu0 %v1029
    %v1031 = vpop.xlane.xlu0 %1030
    %v1032 = vmul.f32 %v1031, 0.0009765625
    %v1033 = vmul.f32 %v1015, %v1015
    %v1034 = vmul.f32 %v1016, %v1016
    %v1035 = vmul.f32 %v1017, %v1017
    %v1036 = vmul.f32 %v1018, %v1018
    %v1037 = vmul.f32 %v1019, %v1019
    %v1038 = vmul.f32 %v1020, %v1020
    %v1039 = vmul.f32 %v1021, %v1021
    %v1040 = vmul.f32 %v1022, %v1022
    %v1041 = vadd.f32 %v1033, %v1034
    %v1042 = vadd.f32 %v1041, %v1035
    %v1043 = vadd.f32 %v1042, %v1036
    %v1044 = vadd.f32 %v1043, %v1037
    %v1045 = vadd.f32 %v1044, %v1038
    %v1046 = vadd.f32 %v1045, %v1039
    %v1047 = vadd.f32 %v1046, %v1040
    %1048 = vadd.xlane.f32.xlu0 %v1047
    %v1049 = vpop.xlane.xlu0 %1048
    %v1050 = vmul.f32 %v1049, 0.0009765625
    %v1051 = vmul.f32 %v1032, %v1032
    %v1052 = vsub.f32 %v1050, %v1051
    %v1053 = vadd.f32 %v1052, 1e-05
    %v1054 = vrsqrt.pop %v1053
    %v1055 = vmul.f32 %v1054, %v1053
    %v1056 = vmul.f32 %v1055, %v1054
    %v1057 = vmul.f32 0.5, %v1056
    %v1058 = vsub.f32 1.5, %v1057
    %v1059 = vmul.f32 %v1054, %v1058
    %vm1060 = vweird.f32 %v1053
    %vm1061 = vweird.f32 %v1054
    %vm1062 = vmor %vm1060, %vm1061
    %v1063 = vsel %vm1062, %v1054, %v1059
    %v1064 = vmul.f32 %v44, %v1063
    %v1065 = vsub.f32 %v1015, %v1032
    %v1066 = vsub.f32 %v1016, %v1032
    %v1067 = vsub.f32 %v1017, %v1032
    %v1068 = vsub.f32 %v1018, %v1032
    %v1069 = vsub.f32 %v1019, %v1032
    %v1070 = vsub.f32 %v1020, %v1032
    %v1071 = vsub.f32 %v1021, %v1032
    %v1072 = vsub.f32 %v1022, %v1032
    %1074 = vset.pattern.permute.xlu0 0
    %1075 = vperm.xlu0 %1074, %v1064
    %v1076 = vpop.permute.xlu0 %1075
    %v1078 = vmul.f32 %v1065, %v1076
    %v1079 = vmul.f32 %v1066, %v1076
    %v1080 = vmul.f32 %v1067, %v1076
    %v1081 = vmul.f32 %v1068, %v1076
    %v1082 = vmul.f32 %v1069, %v1076
    %v1083 = vmul.f32 %v1070, %v1076
    %v1084 = vmul.f32 %v1071, %v1076
    %v1085 = vmul.f32 %v1072, %v1076
    %1087 = vset.pattern.permute.xlu0 0
    %1088 = vperm.xlu0 %1087, %v52
    %v1089 = vpop.permute.xlu0 %1088
    %v1091 = vadd.f32 %v1078, %v1089
    %v1092 = vadd.f32 %v1079, %v1089
    %v1093 = vadd.f32 %v1080, %v1089
    %v1094 = vadd.f32 %v1081, %v1089
    %v1095 = vadd.f32 %v1082, %v1089
    %v1096 = vadd.f32 %v1083, %v1089
    %v1097 = vadd.f32 %v1084, %v1089
    %v1098 = vadd.f32 %v1085, %v1089
    %1100 = vset.pattern.permute.xlu0 0
    %1101 = vperm.xlu0 %1100, %v36
    %v1102 = vpop.permute.xlu0 %1101
    %v1105 = vsel %vm347, %v27, 0
    %1107 = vmatpush.msra.mxu0 0.0
    %1108 = vmatpush.msra.mxu0 0.0
    %1109 = vmatpush.msra.mxu0 0.0
    %1110 = vmatpush.msra.mxu0 0.0
    %1111 = vmatpush.msra.mxu0 0.0
    %1112 = vmatpush.msra.mxu0 0.0
    %1113 = vmatpush.msra.mxu0 0.0
    %1114 = vmatpush.msra.mxu0 0.0
    %1115 = vmatpush.msra.mxu0 0.0
    %1116 = vmatpush.msra.mxu0 0.0
    %1117 = vmatpush.msra.mxu0 0.0
    %1118 = vmatpush.msra.mxu0 0.0
    %1119 = vmatpush.msra.mxu0 0.0
    %1120 = vmatpush.msra.mxu0 0.0
    %1121 = vmatpush.msra.mxu0 0.0
    %1122 = vmatpush.msra.mxu0 %v1091
    %1123 = vmatmul.f32.gmra.mxu0 %v1105
    %v1124 = vpop.f32.mrf.mxu0
    %v1125 = vadd.f32 %v1102, %v1124
    %1126 = vdwg.mxu0
    %1127 = vmatpush.msra.mxu0 0.0
    %1128 = vmatpush.msra.mxu0 0.0
    %1129 = vmatpush.msra.mxu0 0.0
    %1130 = vmatpush.msra.mxu0 0.0
    %1131 = vmatpush.msra.mxu0 0.0
    %1132 = vmatpush.msra.mxu0 0.0
    %1133 = vmatpush.msra.mxu0 0.0
    %1134 = vmatpush.msra.mxu0 0.0
    %1135 = vmatpush.msra.mxu0 0.0
    %1136 = vmatpush.msra.mxu0 0.0
    %1137 = vmatpush.msra.mxu0 0.0
    %1138 = vmatpush.msra.mxu0 0.0
    %1139 = vmatpush.msra.mxu0 0.0
    %1140 = vmatpush.msra.mxu0 0.0
    %1141 = vmatpush.msra.mxu0 0.0
    %1142 = vmatpush.msra.mxu0 %v1092
    %1143 = vmatmul.f32.gmra.mxu0 %v1105
    %v1144 = vpop.f32.mrf.mxu0
    %v1145 = vadd.f32 %v1102, %v1144
    %1146 = vdwg.mxu0
    %1147 = vmatpush.msra.mxu0 0.0
    %1148 = vmatpush.msra.mxu0 0.0
    %1149 = vmatpush.msra.mxu0 0.0
    %1150 = vmatpush.msra.mxu0 0.0
    %1151 = vmatpush.msra.mxu0 0.0
    %1152 = vmatpush.msra.mxu0 0.0
    %1153 = vmatpush.msra.mxu0 0.0
    %1154 = vmatpush.msra.mxu0 0.0
    %1155 = vmatpush.msra.mxu0 0.0
    %1156 = vmatpush.msra.mxu0 0.0
    %1157 = vmatpush.msra.mxu0 0.0
    %1158 = vmatpush.msra.mxu0 0.0
    %1159 = vmatpush.msra.mxu0 0.0
    %1160 = vmatpush.msra.mxu0 0.0
    %1161 = vmatpush.msra.mxu0 0.0
    %1162 = vmatpush.msra.mxu0 %v1093
    %1163 = vmatmul.f32.gmra.mxu0 %v1105
    %v1164 = vpop.f32.mrf.mxu0
    %v1165 = vadd.f32 %v1102, %v1164
    %1166 = vdwg.mxu0
    %1167 = vmatpush.msra.mxu0 0.0
    %1168 = vmatpush.msra.mxu0 0.0
    %1169 = vmatpush.msra.mxu0 0.0
    %1170 = vmatpush.msra.mxu0 0.0
    %1171 = vmatpush.msra.mxu0 0.0
    %1172 = vmatpush.msra.mxu0 0.0
    %1173 = vmatpush.msra.mxu0 0.0
    %1174 = vmatpush.msra.mxu0 0.0
    %1175 = vmatpush.msra.mxu0 0.0
    %1176 = vmatpush.msra.mxu0 0.0
    %1177 = vmatpush.msra.mxu0 0.0
    %1178 = vmatpush.msra.mxu0 0.0
    %1179 = vmatpush.msra.mxu0 0.0
    %1180 = vmatpush.msra.mxu0 0.0
    %1181 = vmatpush.msra.mxu0 0.0
    %1182 = vmatpush.msra.mxu0 %v1094
    %1183 = vmatmul.f32.gmra.mxu0 %v1105
    %v1184 = vpop.f32.mrf.mxu0
    %v1185 = vadd.f32 %v1102, %v1184
    %1186 = vdwg.mxu0
    %1187 = vmatpush.msra.mxu0 0.0
    %1188 = vmatpush.msra.mxu0 0.0
    %1189 = vmatpush.msra.mxu0 0.0
    %1190 = vmatpush.msra.mxu0 0.0
    %1191 = vmatpush.msra.mxu0 0.0
    %1192 = vmatpush.msra.mxu0 0.0
    %1193 = vmatpush.msra.mxu0 0.0
    %1194 = vmatpush.msra.mxu0 0.0
    %1195 = vmatpush.msra.mxu0 0.0
    %1196 = vmatpush.msra.mxu0 0.0
    %1197 = vmatpush.msra.mxu0 0.0
    %1198 = vmatpush.msra.mxu0 0.0
    %1199 = vmatpush.msra.mxu0 0.0
    %1200 = vmatpush.msra.mxu0 0.0
    %1201 = vmatpush.msra.mxu0 0.0
    %1202 = vmatpush.msra.mxu0 %v1095
    %1203 = vmatmul.f32.gmra.mxu0 %v1105
    %v1204 = vpop.f32.mrf.mxu0
    %v1205 = vadd.f32 %v1102, %v1204
    %1206 = vdwg.mxu0
    %1207 = vmatpush.msra.mxu0 0.0
    %1208 = vmatpush.msra.mxu0 0.0
    %1209 = vmatpush.msra.mxu0 0.0
    %1210 = vmatpush.msra.mxu0 0.0
    %1211 = vmatpush.msra.mxu0 0.0
    %1212 = vmatpush.msra.mxu0 0.0
    %1213 = vmatpush.msra.mxu0 0.0
    %1214 = vmatpush.msra.mxu0 0.0
    %1215 = vmatpush.msra.mxu0 0.0
    %1216 = vmatpush.msra.mxu0 0.0
    %1217 = vmatpush.msra.mxu0 0.0
    %1218 = vmatpush.msra.mxu0 0.0
    %1219 = vmatpush.msra.mxu0 0.0
    %1220 = vmatpush.msra.mxu0 0.0
    %1221 = vmatpush.msra.mxu0 0.0
    %1222 = vmatpush.msra.mxu0 %v1096
    %1223 = vmatmul.f32.gmra.mxu0 %v1105
    %v1224 = vpop.f32.mrf.mxu0
    %v1225 = vadd.f32 %v1102, %v1224
    %1226 = vdwg.mxu0
    %1227 = vmatpush.msra.mxu0 0.0
    %1228 = vmatpush.msra.mxu0 0.0
    %1229 = vmatpush.msra.mxu0 0.0
    %1230 = vmatpush.msra.mxu0 0.0
    %1231 = vmatpush.msra.mxu0 0.0
    %1232 = vmatpush.msra.mxu0 0.0
    %1233 = vmatpush.msra.mxu0 0.0
    %1234 = vmatpush.msra.mxu0 0.0
    %1235 = vmatpush.msra.mxu0 0.0
    %1236 = vmatpush.msra.mxu0 0.0
    %1237 = vmatpush.msra.mxu0 0.0
    %1238 = vmatpush.msra.mxu0 0.0
    %1239 = vmatpush.msra.mxu0 0.0
    %1240 = vmatpush.msra.mxu0 0.0
    %1241 = vmatpush.msra.mxu0 0.0
    %1242 = vmatpush.msra.mxu0 %v1097
    %1243 = vmatmul.f32.gmra.mxu0 %v1105
    %v1244 = vpop.f32.mrf.mxu0
    %v1245 = vadd.f32 %v1102, %v1244
    %1246 = vdwg.mxu0
    %1247 = vmatpush.msra.mxu0 0.0
    %1248 = vmatpush.msra.mxu0 0.0
    %1249 = vmatpush.msra.mxu0 0.0
    %1250 = vmatpush.msra.mxu0 0.0
    %1251 = vmatpush.msra.mxu0 0.0
    %1252 = vmatpush.msra.mxu0 0.0
    %1253 = vmatpush.msra.mxu0 0.0
    %1254 = vmatpush.msra.mxu0 0.0
    %1255 = vmatpush.msra.mxu0 0.0
    %1256 = vmatpush.msra.mxu0 0.0
    %1257 = vmatpush.msra.mxu0 0.0
    %1258 = vmatpush.msra.mxu0 0.0
    %1259 = vmatpush.msra.mxu0 0.0
    %1260 = vmatpush.msra.mxu0 0.0
    %1261 = vmatpush.msra.mxu0 0.0
    %1262 = vmatpush.msra.mxu0 %v1098
    %1263 = vmatmul.f32.gmra.mxu0 %v1105
    %v1264 = vpop.f32.mrf.mxu0
    %v1265 = vadd.f32 %v1102, %v1264
    %1266 = vdwg.mxu0
    %v1275 = vrot.slane %v1145, 6
    %v1276 = vrot.slane %v1165, 4
    %v1277 = vrot.slane %v1185, 2
    %v1278 = vrot.slane %v1225, 6
    %v1279 = vrot.slane %v1245, 4
    %v1280 = vrot.slane %v1265, 2
    %vm1281 = vcmask 1041408
    %v1282 = vsel %vm1281, %v1125, %v1275
    %vm1283 = vcmask 1045508
    %v1284 = vsel %vm1283, %v1276, %v1277
    %vm1285 = vcmask 1043456
    %v1286 = vsel %vm1285, %v1282, %v1284
    %v1287 = vsel %vm1281, %v1205, %v1278
    %v1288 = vsel %vm1283, %v1279, %v1280
    %v1289 = vsel %vm1285, %v1287, %v1288
    %1292 = vst [vmem:[#allocation2] sm:$0xff] %v1286
    %1293 = vst [vmem:[#allocation2 + $0x8] sm:$0xff] %v1289
    // Predicated region
    $region14: #{net_forward.1} parent=1 // pred_check
      _
    $region15: #{net_forward.1} parent=1 // pred_check_branch
      %1295 = sbr.rel (0) target = $region17
    $region16: #{net_forward.1} parent=1 // pred_region
      %1297 = vsyncadd [#allocation3], 0
      %s1299 = sshll.u32 [#allocation2], 4
      %s1300 = int_to_ptr.vmem [resolvable:$true] %s1299
      %s1301 = sshll.u32 %s3, 4
      %s1302 = int_to_ptr.hbm [resolvable:$true] %s1301
      %1304 = dma.vmem_to_hbm [thread:$0]  %s1300, 256, %s1302, [#allocation3]
    $region17: #{net_forward.1} parent=1 // pred_fallthru
      _
    // Predicated region
    $region18: #{net_forward.1} parent=1 // pred_check
      _
    $region19: #{net_forward.1} parent=1 // pred_check_branch
      %1306 = sbr.rel (0) target = $region21
    $region20: #{net_forward.1} parent=1 // pred_region
      %1308 = dma.done [#allocation3], 256
    $region21: #{net_forward.1} parent=1 // pred_fallthru
      _
    %1309 = vsyncpa [#allocation3], 1

</llo_original>
